<compile_context>
chip_gen: v5e
topology: v5e:2x2
jax: 0.10.0
libtpu: 0.0.40
codegen_flags: <defaults>
</compile_context>

<pallas_src>
import jax
import jax.numpy as jnp
from jax.experimental import pallas as pl
from jax.experimental.pallas import tpu as pltpu
import numpy as np


def text_embedding_kernel(
    emb_ref,    # (B*L, E)      embedded tokens, time-major rows (row = t*L + l)
    wih1_ref,   # (E, 4H)       lstm1 W_ih^T
    whh1_ref,   # (H, 4H)       lstm1 W_hh^T
    b1_ref,     # (1, 4H)       lstm1 combined bias (b_ih + b_hh)
    wih2_ref,   # (H, 8H)       lstm2 W_ih^T    (hidden2 = 2H)
    whh2_ref,   # (2H, 8H)      lstm2 W_hh^T
    b2_ref,     # (1, 8H)       lstm2 combined bias
    wl1_ref,    # (L, 2H, P)    linear1 W^T viewed per caption slot, lane-padded (P = 128)
    bl1_ref,    # (1, P)
    wl2_ref,    # (P, 1)
    bl2_ref,    # (1, 1)
    out_ref,    # (B, 1)
    outs1_ref,  # scratch (B*L, H)    layer-1 hidden states (time-major)
    outs2_ref,  # scratch (B, L, 2H)  layer-2 hidden states
):
    f32 = jnp.float32
    BL, _ = emb_ref.shape
    H = whh1_ref.shape[0]
    H2 = 2 * H
    L = wl1_ref.shape[0]
    B = BL // L
    P = wl1_ref.shape[2]

    def lstm_cell(pre_t, h, c, whh, hid):
        # pre_t already carries x_t @ W_ih^T + (b_ih + b_hh); only the recurrent
        # matmul sits on the serial critical path.
        gates = pre_t + jnp.dot(h, whh, preferred_element_type=f32)
        i = jax.nn.sigmoid(gates[:, 0 * hid:1 * hid])
        f = jax.nn.sigmoid(gates[:, 1 * hid:2 * hid])
        g = jnp.tanh(gates[:, 2 * hid:3 * hid])
        o = jax.nn.sigmoid(gates[:, 3 * hid:4 * hid])
        c_new = f * c + i * g
        h_new = o * jnp.tanh(c_new)
        return h_new, c_new

    # ---- layer 1: hoisted input-to-gate matmul (single big MXU matmul) ----
    pre1 = jnp.dot(emb_ref[...], wih1_ref[...], preferred_element_type=f32) + b1_ref[...]

    whh1 = whh1_ref[...]
    h1 = jnp.zeros((L, H), f32)
    c1 = jnp.zeros((L, H), f32)
    for t in range(B):                          # B small & static -> fully unrolled
        h1, c1 = lstm_cell(pre1[t * L:(t + 1) * L, :], h1, c1, whh1, H)
        outs1_ref[pl.ds(t * L, L), :] = h1      # only per-step VMEM traffic

    # ---- layer 2: hoisted input-to-gate matmul over all layer-1 outputs ----
    pre2 = jnp.dot(outs1_ref[...], wih2_ref[...], preferred_element_type=f32) + b2_ref[...]

    whh2 = whh2_ref[...]
    h2 = jnp.zeros((L, H2), f32)
    c2 = jnp.zeros((L, H2), f32)
    for t in range(B):
        h2, c2 = lstm_cell(pre2[t * L:(t + 1) * L, :], h2, c2, whh2, H2)
        outs2_ref[t] = h2

    # ---- head: y[b,:] = sum_l outs2[b,l,:] @ W1[l]   (no (B, L*2H) flatten/relayout) ----
    o2 = outs2_ref[...]                         # (B, L, 2H)
    y = jnp.zeros((B, P), f32)
    for l in range(L):
        y = y + jnp.dot(o2[:, l, :], wl1_ref[l], preferred_element_type=f32)
    y = y + bl1_ref[...]
    out = jnp.dot(y, wl2_ref[...], preferred_element_type=f32) + bl2_ref[...]
    out_ref[...] = out.astype(out_ref.dtype)


def text_embedding_forward(x_ids, params):
    """x_ids: (B, L) int32 token ids.  Returns (B, 1) float32."""
    (emb_table, wih1_T, whh1_T, b1, wih2_T, whh2_T, b2, wl1_T, bl1, wl2_T, bl2) = params
    B, L = x_ids.shape
    H = whh1_T.shape[0]
    H2 = 2 * H
    P = wl1_T.shape[1]
    P_pad = P + (-P) % 128                      # lane-dense head width (100 -> 128)

    # embedding lookup = gather (plain-JAX glue); rows are time-major (b*L + l)
    emb = jnp.take(emb_table, x_ids.reshape(-1), axis=0).astype(jnp.float32)   # (B*L, E)

    # linear1 viewed per caption slot and padded to 128 output lanes; zero rows appended
    # to linear2 make the padding exact (no effect on the result).
    wl1_p = jnp.pad(wl1_T.reshape(L, H2, P), ((0, 0), (0, 0), (0, P_pad - P)))
    bl1_p = jnp.pad(bl1, ((0, 0), (0, P_pad - P)))
    wl2_p = jnp.pad(wl2_T, ((0, P_pad - P), (0, 0)))

    vmem = pl.BlockSpec(memory_space=pltpu.MemorySpace.VMEM)
    return pl.pallas_call(
        text_embedding_kernel,
        out_shape=jax.ShapeDtypeStruct((B, 1), jnp.float32),
        in_specs=[vmem] * 11,
        out_specs=vmem,
        scratch_shapes=[
            pltpu.VMEM((B * L, H), jnp.float32),    # layer-1 outputs (time-major)
            pltpu.VMEM((B, L, H2), jnp.float32),    # layer-2 outputs
        ],
        compiler_params=pltpu.CompilerParams(
            vmem_limit_bytes=32 * 1024 * 1024,
        ),
    )(emb, wih1_T, whh1_T, b1, wih2_T, whh2_T, b2, wl1_p, bl1_p, wl2_p, bl2)


def make_params(key, vocab_size, embedding_size, hidden_size, max_caption_length):
    E, H, L = embedding_size, hidden_size, max_caption_length
    ks = jax.random.split(key, 12)

    def unif(k, shape, bound):
        return jax.random.uniform(k, shape, jnp.float32, -bound, bound)

    emb_table = jax.random.normal(ks[0], (vocab_size, E), jnp.float32)

    k1 = 1.0 / np.sqrt(H)
    wih1_T = unif(ks[1], (E, 4 * H), k1)
    whh1_T = unif(ks[2], (H, 4 * H), k1)
    b1 = unif(ks[3], (1, 4 * H), k1)            # combined b_ih + b_hh

    k2 = 1.0 / np.sqrt(2 * H)
    wih2_T = unif(ks[4], (H, 8 * H), k2)
    whh2_T = unif(ks[5], (2 * H, 8 * H), k2)
    b2 = unif(ks[6], (1, 8 * H), k2)

    kl1 = 1.0 / np.sqrt(2 * H * L)
    wl1_T = unif(ks[7], (2 * H * L, 100), kl1)
    bl1 = unif(ks[8], (1, 100), kl1)
    kl2 = 1.0 / np.sqrt(100)
    wl2_T = unif(ks[9], (100, 1), kl2)
    bl2 = unif(ks[10], (1, 1), kl2)

    return (emb_table, wih1_T, whh1_T, b1, wih2_T, whh2_T, b2, wl1_T, bl1, wl2_T, bl2)


def reference_forward(x_ids, params):
    """Pure-JAX reference matching the PyTorch forward exactly (eval mode)."""
    (emb_table, wih1_T, whh1_T, b1, wih2_T, whh2_T, b2, wl1_T, bl1, wl2_T, bl2) = params
    emb = jnp.take(emb_table, x_ids, axis=0).astype(jnp.float32)   # (B, L, E)
    H = whh1_T.shape[0]

    def lstm_layer(seq, wih_T, whh_T, b, hid):
        T, Lb = seq.shape[0], seq.shape[1]
        h = jnp.zeros((Lb, hid), jnp.float32)
        c = jnp.zeros((Lb, hid), jnp.float32)
        outs = []
        for t in range(T):
            gates = seq[t] @ wih_T + h @ whh_T + b
            i = jax.nn.sigmoid(gates[:, :hid])
            f = jax.nn.sigmoid(gates[:, hid:2 * hid])
            g = jnp.tanh(gates[:, 2 * hid:3 * hid])
            o = jax.nn.sigmoid(gates[:, 3 * hid:])
            c = f * c + i * g
            h = o * jnp.tanh(c)
            outs.append(h)
        return jnp.stack(outs, 0)

    o1 = lstm_layer(emb, wih1_T, whh1_T, b1, H)
    o2 = lstm_layer(o1, wih2_T, whh2_T, b2, 2 * H)
    feats = o2.reshape(o2.shape[0], -1)
    return (feats @ wl1_T + bl1) @ wl2_T + bl2


if __name__ == "__main__":
    # small, consistent shapes (L multiple of 8 keeps sublane tiling aligned)
    vocab_size = 50
    embedding_size = 16
    hidden_size = 32
    max_caption_length = 8
    batch = 2

    key = jax.random.PRNGKey(0)
    k_ids, k_par = jax.random.split(key)
    x_ids = jax.random.randint(k_ids, (batch, max_caption_length), 0, vocab_size, dtype=jnp.int32)
    params = make_params(k_par, vocab_size, embedding_size, hidden_size, max_caption_length)

    out = text_embedding_forward(x_ids, params)
    out = jax.block_until_ready(out)

    ref = jax.block_until_ready(reference_forward(x_ids, params))
    assert out.shape == (batch, 1), out.shape
    np.testing.assert_allclose(np.asarray(out), np.asarray(ref), rtol=2e-2, atol=2e-2)

    print("KERNEL_OK")
</pallas_src>

<mosaic_0001>
module attributes {stable_mosaic.version = 11 : i64} {
  func.func @text_embedding_kernel(%arg0: memref<16x16xf32, #tpu.memory_space<vmem>>, %arg1: memref<16x128xf32, #tpu.memory_space<vmem>>, %arg2: memref<32x128xf32, #tpu.memory_space<vmem>>, %arg3: memref<1x128xf32, #tpu.memory_space<vmem>>, %arg4: memref<32x256xf32, #tpu.memory_space<vmem>>, %arg5: memref<64x256xf32, #tpu.memory_space<vmem>>, %arg6: memref<1x256xf32, #tpu.memory_space<vmem>>, %arg7: memref<8x64x128xf32, #tpu.memory_space<vmem>>, %arg8: memref<1x128xf32, #tpu.memory_space<vmem>>, %arg9: memref<128x1xf32, #tpu.memory_space<vmem>>, %arg10: memref<1x1xf32, #tpu.memory_space<vmem>>, %arg11: memref<2x1xf32, #tpu.memory_space<vmem>>, %arg12: memref<16x32xf32, #tpu.memory_space<vmem>>, %arg13: memref<2x8x64xf32, #tpu.memory_space<vmem>>) attributes {dimension_semantics = [], scalar_prefetch = 0 : i64, scratch_operands = 2 : i64, tpu.core_type = #tpu.core_type<tc>} {
    %c0 = arith.constant 0 : index
    %c0_0 = arith.constant 0 : index
    %0 = vector.load %arg0[%c0, %c0_0] : memref<16x16xf32, #tpu.memory_space<vmem>>, vector<16x16xf32>
    %c0_1 = arith.constant 0 : index
    %c0_2 = arith.constant 0 : index
    %1 = vector.load %arg1[%c0_1, %c0_2] : memref<16x128xf32, #tpu.memory_space<vmem>>, vector<16x128xf32>
    %cst = arith.constant dense<0.000000e+00> : vector<16x128xf32>
    %2 = tpu.matmul %0, %1, %cst {dimension_numbers = #tpu.dot_dimension_numbers<[1], [0], [0], [1], [0, 0, 1, 1], [], []>} : vector<16x16xf32>, vector<16x128xf32>, vector<16x128xf32> -> vector<16x128xf32>
    %c0_3 = arith.constant 0 : index
    %c0_4 = arith.constant 0 : index
    %3 = vector.load %arg3[%c0_3, %c0_4] : memref<1x128xf32, #tpu.memory_space<vmem>>, vector<1x128xf32>
    %4 = vector.broadcast %3 : vector<1x128xf32> to vector<16x128xf32>
    %5 = arith.addf %2, %4 : vector<16x128xf32>
    %c0_5 = arith.constant 0 : index
    %c0_6 = arith.constant 0 : index
    %6 = vector.load %arg2[%c0_5, %c0_6] : memref<32x128xf32, #tpu.memory_space<vmem>>, vector<32x128xf32>
    %cst_7 = arith.constant 0.000000e+00 : f32
    %7 = vector.broadcast %cst_7 : f32 to vector<8x32xf32>
    %cst_8 = arith.constant 0.000000e+00 : f32
    %8 = vector.broadcast %cst_8 : f32 to vector<8x32xf32>
    %9 = vector.extract_strided_slice %5 {offsets = [0, 0], sizes = [8, 128], strides = [1, 1]} : vector<16x128xf32> to vector<8x128xf32>
    %cst_9 = arith.constant dense<0.000000e+00> : vector<8x128xf32>
    %10 = tpu.matmul %7, %6, %cst_9 {dimension_numbers = #tpu.dot_dimension_numbers<[1], [0], [0], [1], [0, 0, 1, 1], [], []>} : vector<8x32xf32>, vector<32x128xf32>, vector<8x128xf32> -> vector<8x128xf32>
    %11 = arith.addf %9, %10 : vector<8x128xf32>
    %12 = vector.extract_strided_slice %11 {offsets = [0, 0], sizes = [8, 32], strides = [1, 1]} : vector<8x128xf32> to vector<8x32xf32>
    %13 = arith.negf %12 : vector<8x32xf32>
    %14 = math.exp %13 : vector<8x32xf32>
    %cst_10 = arith.constant 1.000000e+00 : f32
    %15 = vector.broadcast %cst_10 : f32 to vector<8x32xf32>
    %16 = arith.addf %15, %14 : vector<8x32xf32>
    %17 = arith.divf %15, %16 : vector<8x32xf32>
    %18 = vector.extract_strided_slice %11 {offsets = [0, 32], sizes = [8, 32], strides = [1, 1]} : vector<8x128xf32> to vector<8x32xf32>
    %19 = arith.negf %18 : vector<8x32xf32>
    %20 = math.exp %19 : vector<8x32xf32>
    %cst_11 = arith.constant 1.000000e+00 : f32
    %21 = vector.broadcast %cst_11 : f32 to vector<8x32xf32>
    %22 = arith.addf %21, %20 : vector<8x32xf32>
    %23 = arith.divf %21, %22 : vector<8x32xf32>
    %24 = vector.extract_strided_slice %11 {offsets = [0, 64], sizes = [8, 32], strides = [1, 1]} : vector<8x128xf32> to vector<8x32xf32>
    %25 = math.tanh %24 : vector<8x32xf32>
    %26 = vector.extract_strided_slice %11 {offsets = [0, 96], sizes = [8, 32], strides = [1, 1]} : vector<8x128xf32> to vector<8x32xf32>
    %27 = arith.negf %26 : vector<8x32xf32>
    %28 = math.exp %27 : vector<8x32xf32>
    %cst_12 = arith.constant 1.000000e+00 : f32
    %29 = vector.broadcast %cst_12 : f32 to vector<8x32xf32>
    %30 = arith.addf %29, %28 : vector<8x32xf32>
    %31 = arith.divf %29, %30 : vector<8x32xf32>
    %32 = arith.mulf %23, %8 : vector<8x32xf32>
    %33 = arith.mulf %17, %25 : vector<8x32xf32>
    %34 = arith.addf %32, %33 : vector<8x32xf32>
    %35 = math.tanh %34 : vector<8x32xf32>
    %36 = arith.mulf %31, %35 : vector<8x32xf32>
    %c0_13 = arith.constant 0 : index
    %c0_14 = arith.constant 0 : index
    %37 = vector.load %arg12[%c0_13, %c0_14] : memref<16x32xf32, #tpu.memory_space<vmem>>, vector<8x32xf32>
    tpu.vector_store %arg12[%c0_13, %c0_14], %36 {strides = array<i32>} : memref<16x32xf32, #tpu.memory_space<vmem>>, vector<8x32xf32>,
    %38 = vector.extract_strided_slice %5 {offsets = [8, 0], sizes = [8, 128], strides = [1, 1]} : vector<16x128xf32> to vector<8x128xf32>
    %cst_15 = arith.constant dense<0.000000e+00> : vector<8x128xf32>
    %39 = tpu.matmul %36, %6, %cst_15 {dimension_numbers = #tpu.dot_dimension_numbers<[1], [0], [0], [1], [0, 0, 1, 1], [], []>} : vector<8x32xf32>, vector<32x128xf32>, vector<8x128xf32> -> vector<8x128xf32>
    %40 = arith.addf %38, %39 : vector<8x128xf32>
    %41 = vector.extract_strided_slice %40 {offsets = [0, 0], sizes = [8, 32], strides = [1, 1]} : vector<8x128xf32> to vector<8x32xf32>
    %42 = arith.negf %41 : vector<8x32xf32>
    %43 = math.exp %42 : vector<8x32xf32>
    %cst_16 = arith.constant 1.000000e+00 : f32
    %44 = vector.broadcast %cst_16 : f32 to vector<8x32xf32>
    %45 = arith.addf %44, %43 : vector<8x32xf32>
    %46 = arith.divf %44, %45 : vector<8x32xf32>
    %47 = vector.extract_strided_slice %40 {offsets = [0, 32], sizes = [8, 32], strides = [1, 1]} : vector<8x128xf32> to vector<8x32xf32>
    %48 = arith.negf %47 : vector<8x32xf32>
    %49 = math.exp %48 : vector<8x32xf32>
    %cst_17 = arith.constant 1.000000e+00 : f32
    %50 = vector.broadcast %cst_17 : f32 to vector<8x32xf32>
    %51 = arith.addf %50, %49 : vector<8x32xf32>
    %52 = arith.divf %50, %51 : vector<8x32xf32>
    %53 = vector.extract_strided_slice %40 {offsets = [0, 64], sizes = [8, 32], strides = [1, 1]} : vector<8x128xf32> to vector<8x32xf32>
    %54 = math.tanh %53 : vector<8x32xf32>
    %55 = vector.extract_strided_slice %40 {offsets = [0, 96], sizes = [8, 32], strides = [1, 1]} : vector<8x128xf32> to vector<8x32xf32>
    %56 = arith.negf %55 : vector<8x32xf32>
    %57 = math.exp %56 : vector<8x32xf32>
    %cst_18 = arith.constant 1.000000e+00 : f32
    %58 = vector.broadcast %cst_18 : f32 to vector<8x32xf32>
    %59 = arith.addf %58, %57 : vector<8x32xf32>
    %60 = arith.divf %58, %59 : vector<8x32xf32>
    %61 = arith.mulf %52, %34 : vector<8x32xf32>
    %62 = arith.mulf %46, %54 : vector<8x32xf32>
    %63 = arith.addf %61, %62 : vector<8x32xf32>
    %64 = math.tanh %63 : vector<8x32xf32>
    %65 = arith.mulf %60, %64 : vector<8x32xf32>
    %c8 = arith.constant 8 : index
    %c0_19 = arith.constant 0 : index
    %66 = vector.load %arg12[%c8, %c0_19] : memref<16x32xf32, #tpu.memory_space<vmem>>, vector<8x32xf32>
    tpu.vector_store %arg12[%c8, %c0_19], %65 {strides = array<i32>} : memref<16x32xf32, #tpu.memory_space<vmem>>, vector<8x32xf32>,
    %c0_20 = arith.constant 0 : index
    %c0_21 = arith.constant 0 : index
    %67 = vector.load %arg12[%c0_20, %c0_21] : memref<16x32xf32, #tpu.memory_space<vmem>>, vector<16x32xf32>
    %c0_22 = arith.constant 0 : index
    %c0_23 = arith.constant 0 : index
    %68 = vector.load %arg4[%c0_22, %c0_23] : memref<32x256xf32, #tpu.memory_space<vmem>>, vector<32x256xf32>
    %cst_24 = arith.constant dense<0.000000e+00> : vector<16x256xf32>
    %69 = tpu.matmul %67, %68, %cst_24 {dimension_numbers = #tpu.dot_dimension_numbers<[1], [0], [0], [1], [0, 0, 1, 1], [], []>} : vector<16x32xf32>, vector<32x256xf32>, vector<16x256xf32> -> vector<16x256xf32>
    %c0_25 = arith.constant 0 : index
    %c0_26 = arith.constant 0 : index
    %70 = vector.load %arg6[%c0_25, %c0_26] : memref<1x256xf32, #tpu.memory_space<vmem>>, vector<1x256xf32>
    %71 = vector.broadcast %70 : vector<1x256xf32> to vector<16x256xf32>
    %72 = arith.addf %69, %71 : vector<16x256xf32>
    %c0_27 = arith.constant 0 : index
    %c0_28 = arith.constant 0 : index
    %73 = vector.load %arg5[%c0_27, %c0_28] : memref<64x256xf32, #tpu.memory_space<vmem>>, vector<64x256xf32>
    %cst_29 = arith.constant 0.000000e+00 : f32
    %74 = vector.broadcast %cst_29 : f32 to vector<8x64xf32>
    %cst_30 = arith.constant 0.000000e+00 : f32
    %75 = vector.broadcast %cst_30 : f32 to vector<8x64xf32>
    %76 = vector.extract_strided_slice %72 {offsets = [0, 0], sizes = [8, 256], strides = [1, 1]} : vector<16x256xf32> to vector<8x256xf32>
    %cst_31 = arith.constant dense<0.000000e+00> : vector<8x256xf32>
    %77 = tpu.matmul %74, %73, %cst_31 {dimension_numbers = #tpu.dot_dimension_numbers<[1], [0], [0], [1], [0, 0, 1, 1], [], []>} : vector<8x64xf32>, vector<64x256xf32>, vector<8x256xf32> -> vector<8x256xf32>
    %78 = arith.addf %76, %77 : vector<8x256xf32>
    %79 = vector.extract_strided_slice %78 {offsets = [0, 0], sizes = [8, 64], strides = [1, 1]} : vector<8x256xf32> to vector<8x64xf32>
    %80 = arith.negf %79 : vector<8x64xf32>
    %81 = math.exp %80 : vector<8x64xf32>
    %cst_32 = arith.constant 1.000000e+00 : f32
    %82 = vector.broadcast %cst_32 : f32 to vector<8x64xf32>
    %83 = arith.addf %82, %81 : vector<8x64xf32>
    %84 = arith.divf %82, %83 : vector<8x64xf32>
    %85 = vector.extract_strided_slice %78 {offsets = [0, 64], sizes = [8, 64], strides = [1, 1]} : vector<8x256xf32> to vector<8x64xf32>
    %86 = arith.negf %85 : vector<8x64xf32>
    %87 = math.exp %86 : vector<8x64xf32>
    %cst_33 = arith.constant 1.000000e+00 : f32
    %88 = vector.broadcast %cst_33 : f32 to vector<8x64xf32>
    %89 = arith.addf %88, %87 : vector<8x64xf32>
    %90 = arith.divf %88, %89 : vector<8x64xf32>
    %91 = vector.extract_strided_slice %78 {offsets = [0, 128], sizes = [8, 64], strides = [1, 1]} : vector<8x256xf32> to vector<8x64xf32>
    %92 = math.tanh %91 : vector<8x64xf32>
    %93 = vector.extract_strided_slice %78 {offsets = [0, 192], sizes = [8, 64], strides = [1, 1]} : vector<8x256xf32> to vector<8x64xf32>
    %94 = arith.negf %93 : vector<8x64xf32>
    %95 = math.exp %94 : vector<8x64xf32>
    %cst_34 = arith.constant 1.000000e+00 : f32
    %96 = vector.broadcast %cst_34 : f32 to vector<8x64xf32>
    %97 = arith.addf %96, %95 : vector<8x64xf32>
    %98 = arith.divf %96, %97 : vector<8x64xf32>
    %99 = arith.mulf %90, %75 : vector<8x64xf32>
    %100 = arith.mulf %84, %92 : vector<8x64xf32>
    %101 = arith.addf %99, %100 : vector<8x64xf32>
    %102 = math.tanh %101 : vector<8x64xf32>
    %103 = arith.mulf %98, %102 : vector<8x64xf32>
    %c0_35 = arith.constant 0 : index
    %c0_36 = arith.constant 0 : index
    %c0_37 = arith.constant 0 : index
    %104 = vector.load %arg13[%c0_35, %c0_36, %c0_37] : memref<2x8x64xf32, #tpu.memory_space<vmem>>, vector<1x8x64xf32>
    %105 = vector.shape_cast %104 : vector<1x8x64xf32> to vector<8x64xf32>
    %106 = vector.shape_cast %103 : vector<8x64xf32> to vector<1x8x64xf32>
    tpu.vector_store %arg13[%c0_35, %c0_36, %c0_37], %106 {strides = array<i32>} : memref<2x8x64xf32, #tpu.memory_space<vmem>>, vector<1x8x64xf32>,
    %107 = vector.extract_strided_slice %72 {offsets = [8, 0], sizes = [8, 256], strides = [1, 1]} : vector<16x256xf32> to vector<8x256xf32>
    %cst_38 = arith.constant dense<0.000000e+00> : vector<8x256xf32>
    %108 = tpu.matmul %103, %73, %cst_38 {dimension_numbers = #tpu.dot_dimension_numbers<[1], [0], [0], [1], [0, 0, 1, 1], [], []>} : vector<8x64xf32>, vector<64x256xf32>, vector<8x256xf32> -> vector<8x256xf32>
    %109 = arith.addf %107, %108 : vector<8x256xf32>
    %110 = vector.extract_strided_slice %109 {offsets = [0, 0], sizes = [8, 64], strides = [1, 1]} : vector<8x256xf32> to vector<8x64xf32>
    %111 = arith.negf %110 : vector<8x64xf32>
    %112 = math.exp %111 : vector<8x64xf32>
    %cst_39 = arith.constant 1.000000e+00 : f32
    %113 = vector.broadcast %cst_39 : f32 to vector<8x64xf32>
    %114 = arith.addf %113, %112 : vector<8x64xf32>
    %115 = arith.divf %113, %114 : vector<8x64xf32>
    %116 = vector.extract_strided_slice %109 {offsets = [0, 64], sizes = [8, 64], strides = [1, 1]} : vector<8x256xf32> to vector<8x64xf32>
    %117 = arith.negf %116 : vector<8x64xf32>
    %118 = math.exp %117 : vector<8x64xf32>
    %cst_40 = arith.constant 1.000000e+00 : f32
    %119 = vector.broadcast %cst_40 : f32 to vector<8x64xf32>
    %120 = arith.addf %119, %118 : vector<8x64xf32>
    %121 = arith.divf %119, %120 : vector<8x64xf32>
    %122 = vector.extract_strided_slice %109 {offsets = [0, 128], sizes = [8, 64], strides = [1, 1]} : vector<8x256xf32> to vector<8x64xf32>
    %123 = math.tanh %122 : vector<8x64xf32>
    %124 = vector.extract_strided_slice %109 {offsets = [0, 192], sizes = [8, 64], strides = [1, 1]} : vector<8x256xf32> to vector<8x64xf32>
    %125 = arith.negf %124 : vector<8x64xf32>
    %126 = math.exp %125 : vector<8x64xf32>
    %cst_41 = arith.constant 1.000000e+00 : f32
    %127 = vector.broadcast %cst_41 : f32 to vector<8x64xf32>
    %128 = arith.addf %127, %126 : vector<8x64xf32>
    %129 = arith.divf %127, %128 : vector<8x64xf32>
    %130 = arith.mulf %121, %101 : vector<8x64xf32>
    %131 = arith.mulf %115, %123 : vector<8x64xf32>
    %132 = arith.addf %130, %131 : vector<8x64xf32>
    %133 = math.tanh %132 : vector<8x64xf32>
    %134 = arith.mulf %129, %133 : vector<8x64xf32>
    %c1 = arith.constant 1 : index
    %c0_42 = arith.constant 0 : index
    %c0_43 = arith.constant 0 : index
    %135 = vector.load %arg13[%c1, %c0_42, %c0_43] : memref<2x8x64xf32, #tpu.memory_space<vmem>>, vector<1x8x64xf32>
    %136 = vector.shape_cast %135 : vector<1x8x64xf32> to vector<8x64xf32>
    %137 = vector.shape_cast %134 : vector<8x64xf32> to vector<1x8x64xf32>
    tpu.vector_store %arg13[%c1, %c0_42, %c0_43], %137 {strides = array<i32>} : memref<2x8x64xf32, #tpu.memory_space<vmem>>, vector<1x8x64xf32>,
    %c0_44 = arith.constant 0 : index
    %c0_45 = arith.constant 0 : index
    %c0_46 = arith.constant 0 : index
    %138 = vector.load %arg13[%c0_44, %c0_45, %c0_46] : memref<2x8x64xf32, #tpu.memory_space<vmem>>, vector<2x8x64xf32>
    %cst_47 = arith.constant 0.000000e+00 : f32
    %139 = vector.broadcast %cst_47 : f32 to vector<2x128xf32>
    %140 = vector.extract_strided_slice %138 {offsets = [0, 0, 0], sizes = [2, 1, 64], strides = [1, 1, 1]} : vector<2x8x64xf32> to vector<2x1x64xf32>
    %141 = vector.shape_cast %140 : vector<2x1x64xf32> to vector<2x64xf32>
    %c0_48 = arith.constant 0 : index
    %c0_49 = arith.constant 0 : index
    %c0_50 = arith.constant 0 : index
    %142 = vector.load %arg7[%c0_48, %c0_49, %c0_50] : memref<8x64x128xf32, #tpu.memory_space<vmem>>, vector<1x64x128xf32>
    %143 = vector.shape_cast %142 : vector<1x64x128xf32> to vector<64x128xf32>
    %cst_51 = arith.constant dense<0.000000e+00> : vector<2x128xf32>
    %144 = tpu.matmul %141, %143, %cst_51 {dimension_numbers = #tpu.dot_dimension_numbers<[1], [0], [0], [1], [0, 0, 1, 1], [], []>} : vector<2x64xf32>, vector<64x128xf32>, vector<2x128xf32> -> vector<2x128xf32>
    %145 = arith.addf %139, %144 : vector<2x128xf32>
    %146 = vector.extract_strided_slice %138 {offsets = [0, 1, 0], sizes = [2, 1, 64], strides = [1, 1, 1]} : vector<2x8x64xf32> to vector<2x1x64xf32>
    %147 = vector.shape_cast %146 : vector<2x1x64xf32> to vector<2x64xf32>
    %c1_52 = arith.constant 1 : index
    %c0_53 = arith.constant 0 : index
    %c0_54 = arith.constant 0 : index
    %148 = vector.load %arg7[%c1_52, %c0_53, %c0_54] : memref<8x64x128xf32, #tpu.memory_space<vmem>>, vector<1x64x128xf32>
    %149 = vector.shape_cast %148 : vector<1x64x128xf32> to vector<64x128xf32>
    %cst_55 = arith.constant dense<0.000000e+00> : vector<2x128xf32>
    %150 = tpu.matmul %147, %149, %cst_55 {dimension_numbers = #tpu.dot_dimension_numbers<[1], [0], [0], [1], [0, 0, 1, 1], [], []>} : vector<2x64xf32>, vector<64x128xf32>, vector<2x128xf32> -> vector<2x128xf32>
    %151 = arith.addf %145, %150 : vector<2x128xf32>
    %152 = vector.extract_strided_slice %138 {offsets = [0, 2, 0], sizes = [2, 1, 64], strides = [1, 1, 1]} : vector<2x8x64xf32> to vector<2x1x64xf32>
    %153 = vector.shape_cast %152 : vector<2x1x64xf32> to vector<2x64xf32>
    %c2 = arith.constant 2 : index
    %c0_56 = arith.constant 0 : index
    %c0_57 = arith.constant 0 : index
    %154 = vector.load %arg7[%c2, %c0_56, %c0_57] : memref<8x64x128xf32, #tpu.memory_space<vmem>>, vector<1x64x128xf32>
    %155 = vector.shape_cast %154 : vector<1x64x128xf32> to vector<64x128xf32>
    %cst_58 = arith.constant dense<0.000000e+00> : vector<2x128xf32>
    %156 = tpu.matmul %153, %155, %cst_58 {dimension_numbers = #tpu.dot_dimension_numbers<[1], [0], [0], [1], [0, 0, 1, 1], [], []>} : vector<2x64xf32>, vector<64x128xf32>, vector<2x128xf32> -> vector<2x128xf32>
    %157 = arith.addf %151, %156 : vector<2x128xf32>
    %158 = vector.extract_strided_slice %138 {offsets = [0, 3, 0], sizes = [2, 1, 64], strides = [1, 1, 1]} : vector<2x8x64xf32> to vector<2x1x64xf32>
    %159 = vector.shape_cast %158 : vector<2x1x64xf32> to vector<2x64xf32>
    %c3 = arith.constant 3 : index
    %c0_59 = arith.constant 0 : index
    %c0_60 = arith.constant 0 : index
    %160 = vector.load %arg7[%c3, %c0_59, %c0_60] : memref<8x64x128xf32, #tpu.memory_space<vmem>>, vector<1x64x128xf32>
    %161 = vector.shape_cast %160 : vector<1x64x128xf32> to vector<64x128xf32>
    %cst_61 = arith.constant dense<0.000000e+00> : vector<2x128xf32>
    %162 = tpu.matmul %159, %161, %cst_61 {dimension_numbers = #tpu.dot_dimension_numbers<[1], [0], [0], [1], [0, 0, 1, 1], [], []>} : vector<2x64xf32>, vector<64x128xf32>, vector<2x128xf32> -> vector<2x128xf32>
    %163 = arith.addf %157, %162 : vector<2x128xf32>
    %164 = vector.extract_strided_slice %138 {offsets = [0, 4, 0], sizes = [2, 1, 64], strides = [1, 1, 1]} : vector<2x8x64xf32> to vector<2x1x64xf32>
    %165 = vector.shape_cast %164 : vector<2x1x64xf32> to vector<2x64xf32>
    %c4 = arith.constant 4 : index
    %c0_62 = arith.constant 0 : index
    %c0_63 = arith.constant 0 : index
    %166 = vector.load %arg7[%c4, %c0_62, %c0_63] : memref<8x64x128xf32, #tpu.memory_space<vmem>>, vector<1x64x128xf32>
    %167 = vector.shape_cast %166 : vector<1x64x128xf32> to vector<64x128xf32>
    %cst_64 = arith.constant dense<0.000000e+00> : vector<2x128xf32>
    %168 = tpu.matmul %165, %167, %cst_64 {dimension_numbers = #tpu.dot_dimension_numbers<[1], [0], [0], [1], [0, 0, 1, 1], [], []>} : vector<2x64xf32>, vector<64x128xf32>, vector<2x128xf32> -> vector<2x128xf32>
    %169 = arith.addf %163, %168 : vector<2x128xf32>
    %170 = vector.extract_strided_slice %138 {offsets = [0, 5, 0], sizes = [2, 1, 64], strides = [1, 1, 1]} : vector<2x8x64xf32> to vector<2x1x64xf32>
    %171 = vector.shape_cast %170 : vector<2x1x64xf32> to vector<2x64xf32>
    %c5 = arith.constant 5 : index
    %c0_65 = arith.constant 0 : index
    %c0_66 = arith.constant 0 : index
    %172 = vector.load %arg7[%c5, %c0_65, %c0_66] : memref<8x64x128xf32, #tpu.memory_space<vmem>>, vector<1x64x128xf32>
    %173 = vector.shape_cast %172 : vector<1x64x128xf32> to vector<64x128xf32>
    %cst_67 = arith.constant dense<0.000000e+00> : vector<2x128xf32>
    %174 = tpu.matmul %171, %173, %cst_67 {dimension_numbers = #tpu.dot_dimension_numbers<[1], [0], [0], [1], [0, 0, 1, 1], [], []>} : vector<2x64xf32>, vector<64x128xf32>, vector<2x128xf32> -> vector<2x128xf32>
    %175 = arith.addf %169, %174 : vector<2x128xf32>
    %176 = vector.extract_strided_slice %138 {offsets = [0, 6, 0], sizes = [2, 1, 64], strides = [1, 1, 1]} : vector<2x8x64xf32> to vector<2x1x64xf32>
    %177 = vector.shape_cast %176 : vector<2x1x64xf32> to vector<2x64xf32>
    %c6 = arith.constant 6 : index
    %c0_68 = arith.constant 0 : index
    %c0_69 = arith.constant 0 : index
    %178 = vector.load %arg7[%c6, %c0_68, %c0_69] : memref<8x64x128xf32, #tpu.memory_space<vmem>>, vector<1x64x128xf32>
    %179 = vector.shape_cast %178 : vector<1x64x128xf32> to vector<64x128xf32>
    %cst_70 = arith.constant dense<0.000000e+00> : vector<2x128xf32>
    %180 = tpu.matmul %177, %179, %cst_70 {dimension_numbers = #tpu.dot_dimension_numbers<[1], [0], [0], [1], [0, 0, 1, 1], [], []>} : vector<2x64xf32>, vector<64x128xf32>, vector<2x128xf32> -> vector<2x128xf32>
    %181 = arith.addf %175, %180 : vector<2x128xf32>
    %182 = vector.extract_strided_slice %138 {offsets = [0, 7, 0], sizes = [2, 1, 64], strides = [1, 1, 1]} : vector<2x8x64xf32> to vector<2x1x64xf32>
    %183 = vector.shape_cast %182 : vector<2x1x64xf32> to vector<2x64xf32>
    %c7 = arith.constant 7 : index
    %c0_71 = arith.constant 0 : index
    %c0_72 = arith.constant 0 : index
    %184 = vector.load %arg7[%c7, %c0_71, %c0_72] : memref<8x64x128xf32, #tpu.memory_space<vmem>>, vector<1x64x128xf32>
    %185 = vector.shape_cast %184 : vector<1x64x128xf32> to vector<64x128xf32>
    %cst_73 = arith.constant dense<0.000000e+00> : vector<2x128xf32>
    %186 = tpu.matmul %183, %185, %cst_73 {dimension_numbers = #tpu.dot_dimension_numbers<[1], [0], [0], [1], [0, 0, 1, 1], [], []>} : vector<2x64xf32>, vector<64x128xf32>, vector<2x128xf32> -> vector<2x128xf32>
    %187 = arith.addf %181, %186 : vector<2x128xf32>
    %c0_74 = arith.constant 0 : index
    %c0_75 = arith.constant 0 : index
    %188 = vector.load %arg8[%c0_74, %c0_75] : memref<1x128xf32, #tpu.memory_space<vmem>>, vector<1x128xf32>
    %189 = vector.broadcast %188 : vector<1x128xf32> to vector<2x128xf32>
    %190 = arith.addf %187, %189 : vector<2x128xf32>
    %c0_76 = arith.constant 0 : index
    %c0_77 = arith.constant 0 : index
    %191 = vector.load %arg9[%c0_76, %c0_77] : memref<128x1xf32, #tpu.memory_space<vmem>>, vector<128x1xf32>
    %cst_78 = arith.constant dense<0.000000e+00> : vector<2x1xf32>
    %192 = tpu.matmul %190, %191, %cst_78 {dimension_numbers = #tpu.dot_dimension_numbers<[1], [0], [0], [1], [0, 0, 1, 1], [], []>} : vector<2x128xf32>, vector<128x1xf32>, vector<2x1xf32> -> vector<2x1xf32>
    %c0_79 = arith.constant 0 : index
    %c0_80 = arith.constant 0 : index
    %193 = vector.load %arg10[%c0_79, %c0_80] : memref<1x1xf32, #tpu.memory_space<vmem>>, vector<1x1xf32>
    %194 = vector.broadcast %193 : vector<1x1xf32> to vector<2x1xf32>
    %195 = arith.addf %192, %194 : vector<2x1xf32>
    %c0_81 = arith.constant 0 : index
    %c0_82 = arith.constant 0 : index
    %196 = vector.load %arg11[%c0_81, %c0_82] : memref<2x1xf32, #tpu.memory_space<vmem>>, vector<2x1xf32>
    tpu.vector_store %arg11[%c0_81, %c0_82], %195 {strides = array<i32>} : memref<2x1xf32, #tpu.memory_space<vmem>>, vector<2x1xf32>,
    return
  }
}

</mosaic_0001>

<llo_original>
// kernel: tpu_custom_call.1
$region0: #{tpu_custom_call.1}
  #allocation0 [shape = 'u32[]', space=smem, size = 0x4, offset = 0x4, fixed_abs, tag = 'smem constant byte address 0x4 - core index']
  #allocation1 [shape = 'u32[72,128]{1,0:T(1,128)}', space=vmem, size = 0x9000, scoped, tag = 'internal scratch']
  #allocation2 [shape = 'f32[16,32]{1,0:T(8,128)}', space=vmem, size = 0x2000, scoped, tag = 'scratch operand']
  #allocation3 [shape = 'f32[2,8,64]{2,1,0:T(8,128)}', space=vmem, size = 0x2000, scoped, tag = 'scratch operand']
  #allocation4 [shape = 'f32[1,1]{1,0:T(1,128)S(1)}', space=vmem, size = 0x200, scoped, tag = 'scoped memory for tpu_custom_call.1']
  %s0 = inlined_call_operand.hbm [shape: f32[16,16], index: 0, kind: input, shape index: {}]
  %s1 = inlined_call_operand.hbm [shape: f32[16,128], index: 1, kind: input, shape index: {}]
  %s2 = inlined_call_operand.hbm [shape: f32[32,128], index: 2, kind: input, shape index: {}]
  %s3 = inlined_call_operand.vmem [shape: f32[1,128], index: 3, kind: input, shape index: {}]
  %s4 = inlined_call_operand.hbm [shape: f32[32,256], index: 4, kind: input, shape index: {}]
  %s5 = inlined_call_operand.vmem [shape: f32[64,256], index: 5, kind: input, shape index: {}]
  %s6 = inlined_call_operand.vmem [shape: f32[1,256], index: 6, kind: input, shape index: {}]
  %s7 = inlined_call_operand.hbm [shape: f32[8,64,128], index: 7, kind: input, shape index: {}]
  %s8 = inlined_call_operand.vmem [shape: f32[1,128], index: 8, kind: input, shape index: {}]
  %s9 = inlined_call_operand.vmem [shape: f32[128,1], index: 9, kind: input, shape index: {}]
  %s10 = inlined_call_operand.<no memory space> [shape: f32[1,1], index: 10, kind: input, shape index: {}]
  %s11 = inlined_call_operand.vmem [shape: f32[2,1], index: 11, kind: output, shape index: {}]
  %s12 = sld [smem:[#allocation0]]
  $region74: #{tpu_custom_call.1} parent=0
    _
  %s14 = ssub.s32 1, %s12
  %s15 = scalar_select 0, %s14, %s12
  %v16 = vstv %s10
  %17 = vst [vmem:[#allocation4] sm:$0x1] %v16
  $region1: #{tpu_custom_call.1} parent=0
    #allocation5 [shape = 'u8[8192]{0}', space=vmem, size = 0x2000, scoped, tag = 'input window, operand 0, single buffered']
    #allocation6 [shape = 's32[1]{0}', space=sflag, size = 0x4, scoped, tag = 'scoped memory for tpu_custom_call.1']
    #allocation7 [shape = 'u8[8192]{0}', space=vmem, size = 0x2000, scoped, tag = 'input window, operand 1, single buffered']
    #allocation8 [shape = 's32[1]{0}', space=sflag, size = 0x4, scoped, tag = 'scoped memory for tpu_custom_call.1']
    #allocation9 [shape = 'u8[16384]{0}', space=vmem, size = 0x4000, scoped, tag = 'input window, operand 2, single buffered']
    #allocation10 [shape = 'u8[32768]{0}', space=vmem, size = 0x8000, scoped, tag = 'input window, operand 4, single buffered']
    #allocation11 [shape = 's32[1]{0}', space=sflag, size = 0x4, scoped, tag = 'scoped memory for tpu_custom_call.1']
    #allocation12 [shape = 'u8[262144]{0}', space=vmem, size = 0x40000, scoped, tag = 'input window, operand 7, single buffered']
    %18 = vsyncpa [#allocation6], 0
    %19 = vsyncpa [#allocation8], 0
    %20 = vsyncpa [#allocation11], 0
    // Predicated region
    $region2: #{tpu_custom_call.1} parent=1 // pred_check
      _
    $region3: #{tpu_custom_call.1} parent=1 // pred_check_branch
      %22 = sbr.rel (0) target = $region5
    $region4: #{tpu_custom_call.1} parent=1 // pred_region
      %24 = vsyncadd [#allocation6], 0
      %s25 = sshll.u32 %s0, 4
      %s26 = int_to_ptr.hbm [resolvable:$true] %s25
      %s27 = sshll.u32 [#allocation5], 4
      %s28 = int_to_ptr.vmem [resolvable:$true] %s27
      %33 = dma.hbm_to_vmem [thread:$0]  %s26, 256, %s28, [#allocation6], 128, 128, 8
    $region5: #{tpu_custom_call.1} parent=1 // pred_fallthru
      _
    // Predicated region
    $region6: #{tpu_custom_call.1} parent=1 // pred_check
      _
    $region7: #{tpu_custom_call.1} parent=1 // pred_check_branch
      %35 = sbr.rel (0) target = $region9
    $region8: #{tpu_custom_call.1} parent=1 // pred_region
      %37 = vsyncadd [#allocation8], 0
      %s38 = sshll.u32 %s1, 4
      %s39 = int_to_ptr.hbm [resolvable:$true] %s38
      %s40 = sshll.u32 [#allocation7], 4
      %s41 = int_to_ptr.vmem [resolvable:$true] %s40
      %46 = dma.hbm_to_vmem [thread:$0]  %s39, 256, %s41, [#allocation8], 128, 128, 8
    $region9: #{tpu_custom_call.1} parent=1 // pred_fallthru
      _
    // Predicated region
    $region10: #{tpu_custom_call.1} parent=1 // pred_check
      _
    $region11: #{tpu_custom_call.1} parent=1 // pred_check_branch
      %48 = sbr.rel (0) target = $region13
    $region12: #{tpu_custom_call.1} parent=1 // pred_region
      %50 = vsyncadd [#allocation8], 0
      %s51 = sshll.u32 %s2, 4
      %s52 = int_to_ptr.hbm [resolvable:$true] %s51
      %s53 = sshll.u32 [#allocation9], 4
      %s54 = int_to_ptr.vmem [resolvable:$true] %s53
      %59 = dma.hbm_to_vmem [thread:$0]  %s52, 512, %s54, [#allocation8], 128, 128, 8
    $region13: #{tpu_custom_call.1} parent=1 // pred_fallthru
      _
    // Predicated region
    $region14: #{tpu_custom_call.1} parent=1 // pred_check
      _
    $region15: #{tpu_custom_call.1} parent=1 // pred_check_branch
      %61 = sbr.rel (0) target = $region17
    $region16: #{tpu_custom_call.1} parent=1 // pred_region
      _
    $region17: #{tpu_custom_call.1} parent=1 // pred_fallthru
      _
    // Predicated region
    $region18: #{tpu_custom_call.1} parent=1 // pred_check
      _
    $region19: #{tpu_custom_call.1} parent=1 // pred_check_branch
      %63 = sbr.rel (0) target = $region21
    $region20: #{tpu_custom_call.1} parent=1 // pred_region
      %65 = vsyncadd [#allocation11], 0
      %s66 = sshll.u32 %s4, 4
      %s67 = int_to_ptr.hbm [resolvable:$true] %s66
      %s68 = sshll.u32 [#allocation10], 4
      %s69 = int_to_ptr.vmem [resolvable:$true] %s68
      %74 = dma.hbm_to_vmem [thread:$0]  %s67, 1024, %s69, [#allocation11], 256, 256, 16
    $region21: #{tpu_custom_call.1} parent=1 // pred_fallthru
      _
    // Predicated region
    $region22: #{tpu_custom_call.1} parent=1 // pred_check
      _
    $region23: #{tpu_custom_call.1} parent=1 // pred_check_branch
      %76 = sbr.rel (0) target = $region25
    $region24: #{tpu_custom_call.1} parent=1 // pred_region
      _
    $region25: #{tpu_custom_call.1} parent=1 // pred_fallthru
      _
    // Predicated region
    $region26: #{tpu_custom_call.1} parent=1 // pred_check
      _
    $region27: #{tpu_custom_call.1} parent=1 // pred_check_branch
      %78 = sbr.rel (0) target = $region29
    $region28: #{tpu_custom_call.1} parent=1 // pred_region
      _
    $region29: #{tpu_custom_call.1} parent=1 // pred_fallthru
      _
    // Predicated region
    $region30: #{tpu_custom_call.1} parent=1 // pred_check
      _
    $region31: #{tpu_custom_call.1} parent=1 // pred_check_branch
      %80 = sbr.rel (0) target = $region33
    $region32: #{tpu_custom_call.1} parent=1 // pred_region
      %82 = vsyncadd [#allocation11], 0
      %s83 = sshll.u32 %s7, 4
      %s84 = int_to_ptr.hbm [resolvable:$true] %s83
      %s85 = sshll.u32 [#allocation12], 4
      %s86 = int_to_ptr.vmem [resolvable:$true] %s85
      %91 = dma.hbm_to_vmem [thread:$0]  %s84, 8192, %s86, [#allocation11], 128, 128, 8
    $region33: #{tpu_custom_call.1} parent=1 // pred_fallthru
      _
    // Predicated region
    $region34: #{tpu_custom_call.1} parent=1 // pred_check
      _
    $region35: #{tpu_custom_call.1} parent=1 // pred_check_branch
      %93 = sbr.rel (0) target = $region37
    $region36: #{tpu_custom_call.1} parent=1 // pred_region
      _
    $region37: #{tpu_custom_call.1} parent=1 // pred_fallthru
      _
    // Predicated region
    $region38: #{tpu_custom_call.1} parent=1 // pred_check
      _
    $region39: #{tpu_custom_call.1} parent=1 // pred_check_branch
      %95 = sbr.rel (0) target = $region41
    $region40: #{tpu_custom_call.1} parent=1 // pred_region
      _
    $region41: #{tpu_custom_call.1} parent=1 // pred_fallthru
      _
    // Predicated region
    $region42: #{tpu_custom_call.1} parent=1 // pred_check
      _
    $region43: #{tpu_custom_call.1} parent=1 // pred_check_branch
      %97 = sbr.rel (0) target = $region45
    $region44: #{tpu_custom_call.1} parent=1 // pred_region
      _
    $region45: #{tpu_custom_call.1} parent=1 // pred_fallthru
      _
    // Predicated region
    $region46: #{tpu_custom_call.1} parent=1 // pred_check
      _
    $region47: #{tpu_custom_call.1} parent=1 // pred_check_branch
      %99 = sbr.rel (0) target = $region49
    $region48: #{tpu_custom_call.1} parent=1 // pred_region
      %101 = dma.done [#allocation6], 256
    $region49: #{tpu_custom_call.1} parent=1 // pred_fallthru
      _
    // Predicated region
    $region50: #{tpu_custom_call.1} parent=1 // pred_check
      _
    $region51: #{tpu_custom_call.1} parent=1 // pred_check_branch
      %103 = sbr.rel (0) target = $region53
    $region52: #{tpu_custom_call.1} parent=1 // pred_region
      %105 = dma.done [#allocation8], 256
    $region53: #{tpu_custom_call.1} parent=1 // pred_fallthru
      _
    // Predicated region
    $region54: #{tpu_custom_call.1} parent=1 // pred_check
      _
    $region55: #{tpu_custom_call.1} parent=1 // pred_check_branch
      %107 = sbr.rel (0) target = $region57
    $region56: #{tpu_custom_call.1} parent=1 // pred_region
      %109 = dma.done [#allocation8], 512
    $region57: #{tpu_custom_call.1} parent=1 // pred_fallthru
      _
    // Predicated region
    $region58: #{tpu_custom_call.1} parent=1 // pred_check
      _
    $region59: #{tpu_custom_call.1} parent=1 // pred_check_branch
      %111 = sbr.rel (0) target = $region61
    $region60: #{tpu_custom_call.1} parent=1 // pred_region
      %113 = dma.done [#allocation11], 1024
    $region61: #{tpu_custom_call.1} parent=1 // pred_fallthru
      _
    // Predicated region
    $region62: #{tpu_custom_call.1} parent=1 // pred_check
      _
    $region63: #{tpu_custom_call.1} parent=1 // pred_check_branch
      %115 = sbr.rel (0) target = $region65
    $region64: #{tpu_custom_call.1} parent=1 // pred_region
      %117 = dma.done [#allocation11], 8192
    $region65: #{tpu_custom_call.1} parent=1 // pred_fallthru
      _
    %v118 = vld [vmem:[#allocation5] sm:$0xff]
    %v119 = vld [vmem:[#allocation5 + $0x8] sm:$0xff]
    %v120 = vld [vmem:[#allocation7] sm:$0xff]
    %v121 = vld [vmem:[#allocation7 + $0x8] sm:$0xff]
    %v122 = vld [vmem:[%s3] sm:$0x1]
    %v124 = vperm.slane %v122, 0
    %vm126 = vcmask 130048
    %v128 = vsel %vm126, %v118, 0
    %v131 = vsel %vm126, %v119, 0
    %133 = vmatpush.msra.mxu0 0.0
    %134 = vmatpush.msra.mxu0 0.0
    %135 = vmatpush.msra.mxu0 0.0
    %136 = vmatpush.msra.mxu0 0.0
    %137 = vmatpush.msra.mxu0 0.0
    %138 = vmatpush.msra.mxu0 0.0
    %139 = vmatpush.msra.mxu0 0.0
    %140 = vmatpush.msra.mxu0 0.0
    %141 = vmatpush.msra.mxu0 0.0
    %142 = vmatpush.msra.mxu0 0.0
    %143 = vmatpush.msra.mxu0 0.0
    %144 = vmatpush.msra.mxu0 0.0
    %145 = vmatpush.msra.mxu0 0.0
    %146 = vmatpush.msra.mxu0 0.0
    %147 = vmatpush.msra.mxu0 %v121
    %148 = vmatpush.msra.mxu0 %v120
    %149 = vmatmul.f32.gmra.mxu0 %v128
    %v150 = vpop.f32.mrf.mxu0
    %v151 = vadd.f32 %v124, %v150
    %152 = vmatmul.f32.gmra.mxu0 %v131
    %v153 = vpop.f32.mrf.mxu0
    %v154 = vadd.f32 %v124, %v153
    %155 = vdwg.mxu0
    %v156 = vld [vmem:[#allocation9] sm:$0xff]
    %v157 = vld [vmem:[#allocation9 + $0x8] sm:$0xff]
    %v158 = vld [vmem:[#allocation9 + $0x10] sm:$0xff]
    %v159 = vld [vmem:[#allocation9 + $0x18] sm:$0xff]
    %vm160 = vcmask 261120
    %v162 = vsel %vm160, 0.0, 0
    %164 = vmatpush.msra.mxu0 0.0
    %165 = vmatpush.msra.mxu0 0.0
    %166 = vmatpush.msra.mxu0 0.0
    %167 = vmatpush.msra.mxu0 0.0
    %168 = vmatpush.msra.mxu0 0.0
    %169 = vmatpush.msra.mxu0 0.0
    %170 = vmatpush.msra.mxu0 0.0
    %171 = vmatpush.msra.mxu0 0.0
    %172 = vmatpush.msra.mxu0 0.0
    %173 = vmatpush.msra.mxu0 0.0
    %174 = vmatpush.msra.mxu0 0.0
    %175 = vmatpush.msra.mxu0 0.0
    %176 = vmatpush.msra.mxu0 %v159
    %177 = vmatpush.msra.mxu0 %v158
    %178 = vmatpush.msra.mxu0 %v157
    %179 = vmatpush.msra.mxu0 %v156
    %180 = vmatmul.f32.gmra.mxu0 %v162
    %v181 = vpop.f32.mrf.mxu0
    %v182 = vadd.f32 0.0, %v181
    %183 = vdwg.mxu0
    %v184 = vadd.f32 %v151, %v182
    %v185 = vxor.u32 %v184, 2147483648
    %v186 = vmul.f32 %v185, 1.442695
    %v187 = vpow.pop %v186
    %v188 = vadd.f32 %v187, 1.0
    %v189 = vrcp.pop %v188
    %v190 = vmul.f32 %v188, %v189
    %v191 = vsub.f32 1.0, %v190
    %v192 = vmul.f32 %v189, %v191
    %v193 = vadd.f32 %v189, %v192
    %vm194 = vweird.f32 %v188
    %vm195 = vweird.f32 %v189
    %vm196 = vmor %vm194, %vm195
    %v197 = vsel %vm196, %v189, %v193
    %v198 = vand.u32 2147483647, %v188
    %vm199 = vcmp.eq.f32.partialorder %v198, 8.507059e+37
    %v200 = vand.u32 %v188, 2147483648
    %v201 = vor.u32 1.1754944e-38, %v200
    %v202 = vsel %vm199, %v201, %v197
    %v203 = vmul.f32 1.0, %v202
    %v204 = vtanh.pop %v184
    %v205 = vmul.f32 %v203, 0.0
    %207 = vrot.lane.b32.xlu0 %v204, 64
    %v208 = vpop.permute.xlu0 %207
    %v210 = vmul.f32 %v203, %v208
    %212 = vrot.lane.b32.xlu0 %v210, 32
    %v213 = vpop.permute.xlu0 %212
    %v215 = vadd.f32 %v205, %v213
    %v216 = vtanh.pop %v215
    %218 = vrot.lane.b32.xlu0 %v216, 64
    %v219 = vpop.permute.xlu0 %218
    %v221 = vmul.f32 %v203, %v219
    %223 = vrot.lane.b32.xlu0 %v221, 32
    %v224 = vpop.permute.xlu0 %223
    %226 = vst.msk [vmem:[#allocation2] sm:$0xff] %vm160, %v224
    %v227 = vsel %vm160, %v224, 0
    %229 = vmatpush.msra.mxu0 0.0
    %230 = vmatpush.msra.mxu0 0.0
    %231 = vmatpush.msra.mxu0 0.0
    %232 = vmatpush.msra.mxu0 0.0
    %233 = vmatpush.msra.mxu0 0.0
    %234 = vmatpush.msra.mxu0 0.0
    %235 = vmatpush.msra.mxu0 0.0
    %236 = vmatpush.msra.mxu0 0.0
    %237 = vmatpush.msra.mxu0 0.0
    %238 = vmatpush.msra.mxu0 0.0
    %239 = vmatpush.msra.mxu0 0.0
    %240 = vmatpush.msra.mxu0 0.0
    %241 = vmatpush.msra.mxu0 %v159
    %242 = vmatpush.msra.mxu0 %v158
    %243 = vmatpush.msra.mxu0 %v157
    %244 = vmatpush.msra.mxu0 %v156
    %245 = vmatmul.f32.gmra.mxu0 %v227
    %v246 = vpop.f32.mrf.mxu0
    %v247 = vadd.f32 0.0, %v246
    %248 = vdwg.mxu0
    %v249 = vadd.f32 %v154, %v247
    %v250 = vxor.u32 %v249, 2147483648
    %v251 = vmul.f32 %v250, 1.442695
    %v252 = vpow.pop %v251
    %v253 = vadd.f32 %v252, 1.0
    %v254 = vrcp.pop %v253
    %v255 = vmul.f32 %v253, %v254
    %v256 = vsub.f32 1.0, %v255
    %v257 = vmul.f32 %v254, %v256
    %v258 = vadd.f32 %v254, %v257
    %vm259 = vweird.f32 %v253
    %vm260 = vweird.f32 %v254
    %vm261 = vmor %vm259, %vm260
    %v262 = vsel %vm261, %v254, %v258
    %v263 = vand.u32 2147483647, %v253
    %vm264 = vcmp.eq.f32.partialorder %v263, 8.507059e+37
    %v265 = vand.u32 %v253, 2147483648
    %v266 = vor.u32 1.1754944e-38, %v265
    %v267 = vsel %vm264, %v266, %v262
    %v268 = vmul.f32 1.0, %v267
    %v269 = vtanh.pop %v249
    %v270 = vmul.f32 %v268, %v215
    %272 = vrot.lane.b32.xlu0 %v269, 64
    %v273 = vpop.permute.xlu0 %272
    %v275 = vmul.f32 %v268, %v273
    %277 = vrot.lane.b32.xlu0 %v275, 32
    %v278 = vpop.permute.xlu0 %277
    %v280 = vadd.f32 %v270, %v278
    %v281 = vtanh.pop %v280
    %283 = vrot.lane.b32.xlu0 %v281, 64
    %v284 = vpop.permute.xlu0 %283
    %v286 = vmul.f32 %v268, %v284
    %288 = vrot.lane.b32.xlu0 %v286, 32
    %v289 = vpop.permute.xlu0 %288
    %291 = vst.msk [vmem:[#allocation2 + $0x8] sm:$0xff] %vm160, %v289
    %v292 = vld [vmem:[#allocation2] sm:$0xff]
    %v293 = vld [vmem:[#allocation2 + $0x8] sm:$0xff]
    %v294 = vld [vmem:[#allocation10] sm:$0xff]
    %v295 = vld [vmem:[#allocation10 + $0x8] sm:$0xff]
    %v296 = vld [vmem:[#allocation10 + $0x10] sm:$0xff]
    %v297 = vld [vmem:[#allocation10 + $0x18] sm:$0xff]
    %v298 = vld [vmem:[#allocation10 + $0x20] sm:$0xff]
    %v299 = vld [vmem:[#allocation10 + $0x28] sm:$0xff]
    %v300 = vld [vmem:[#allocation10 + $0x30] sm:$0xff]
    %v301 = vld [vmem:[#allocation10 + $0x38] sm:$0xff]
    %v302 = vld [vmem:[%s6] sm:$0x3]
    %v304 = vperm.slane %v302, 0
    %v305 = vperm.slane %v302, 1
    %v309 = vsel %vm160, %v292, 0
    %v312 = vsel %vm160, %v293, 0
    %314 = vmatpush.msra.mxu0 0.0
    %315 = vmatpush.msra.mxu0 0.0
    %316 = vmatpush.msra.mxu0 0.0
    %317 = vmatpush.msra.mxu0 0.0
    %318 = vmatpush.msra.mxu0 0.0
    %319 = vmatpush.msra.mxu0 0.0
    %320 = vmatpush.msra.mxu0 0.0
    %321 = vmatpush.msra.mxu0 0.0
    %322 = vmatpush.msra.mxu0 0.0
    %323 = vmatpush.msra.mxu0 0.0
    %324 = vmatpush.msra.mxu0 0.0
    %325 = vmatpush.msra.mxu0 0.0
    %326 = vmatpush.msra.mxu0 %v300
    %327 = vmatpush.msra.mxu0 %v298
    %328 = vmatpush.msra.mxu0 %v296
    %329 = vmatpush.msra.mxu0 %v294
    %330 = vmatmul.f32.gmra.mxu0 %v309
    %v331 = vpop.f32.mrf.mxu0
    %v332 = vadd.f32 %v304, %v331
    %333 = vmatmul.f32.gmra.mxu0 %v312
    %v334 = vpop.f32.mrf.mxu0
    %v335 = vadd.f32 %v304, %v334
    %336 = vdwg.mxu0
    %337 = vmatpush.msra.mxu0 0.0
    %338 = vmatpush.msra.mxu0 0.0
    %339 = vmatpush.msra.mxu0 0.0
    %340 = vmatpush.msra.mxu0 0.0
    %341 = vmatpush.msra.mxu0 0.0
    %342 = vmatpush.msra.mxu0 0.0
    %343 = vmatpush.msra.mxu0 0.0
    %344 = vmatpush.msra.mxu0 0.0
    %345 = vmatpush.msra.mxu0 0.0
    %346 = vmatpush.msra.mxu0 0.0
    %347 = vmatpush.msra.mxu0 0.0
    %348 = vmatpush.msra.mxu0 0.0
    %349 = vmatpush.msra.mxu0 %v301
    %350 = vmatpush.msra.mxu0 %v299
    %351 = vmatpush.msra.mxu0 %v297
    %352 = vmatpush.msra.mxu0 %v295
    %353 = vmatmul.f32.gmra.mxu0 %v309
    %v354 = vpop.f32.mrf.mxu0
    %v355 = vadd.f32 %v305, %v354
    %356 = vmatmul.f32.gmra.mxu0 %v312
    %v357 = vpop.f32.mrf.mxu0
    %v358 = vadd.f32 %v305, %v357
    %359 = vdwg.mxu0
    %v360 = vld [vmem:[%s5] sm:$0xff]
    %v361 = vld [vmem:[%s5 + $0x8] sm:$0xff]
    %v362 = vld [vmem:[%s5 + $0x10] sm:$0xff]
    %v363 = vld [vmem:[%s5 + $0x18] sm:$0xff]
    %v364 = vld [vmem:[%s5 + $0x20] sm:$0xff]
    %v365 = vld [vmem:[%s5 + $0x28] sm:$0xff]
    %v366 = vld [vmem:[%s5 + $0x30] sm:$0xff]
    %v367 = vld [vmem:[%s5 + $0x38] sm:$0xff]
    %v368 = vld [vmem:[%s5 + $0x40] sm:$0xff]
    %v369 = vld [vmem:[%s5 + $0x48] sm:$0xff]
    %v370 = vld [vmem:[%s5 + $0x50] sm:$0xff]
    %v371 = vld [vmem:[%s5 + $0x58] sm:$0xff]
    %v372 = vld [vmem:[%s5 + $0x60] sm:$0xff]
    %v373 = vld [vmem:[%s5 + $0x68] sm:$0xff]
    %v374 = vld [vmem:[%s5 + $0x70] sm:$0xff]
    %v375 = vld [vmem:[%s5 + $0x78] sm:$0xff]
    %vm376 = vcmask 523264
    %v377 = vsel %vm376, 0.0, 0
    %379 = vmatpush.msra.mxu0 0.0
    %380 = vmatpush.msra.mxu0 0.0
    %381 = vmatpush.msra.mxu0 0.0
    %382 = vmatpush.msra.mxu0 0.0
    %383 = vmatpush.msra.mxu0 0.0
    %384 = vmatpush.msra.mxu0 0.0
    %385 = vmatpush.msra.mxu0 0.0
    %386 = vmatpush.msra.mxu0 0.0
    %387 = vmatpush.msra.mxu0 %v374
    %388 = vmatpush.msra.mxu0 %v372
    %389 = vmatpush.msra.mxu0 %v370
    %390 = vmatpush.msra.mxu0 %v368
    %391 = vmatpush.msra.mxu0 %v366
    %392 = vmatpush.msra.mxu0 %v364
    %393 = vmatpush.msra.mxu0 %v362
    %394 = vmatpush.msra.mxu0 %v360
    %395 = vmatmul.f32.gmra.mxu0 %v377
    %v396 = vpop.f32.mrf.mxu0
    %v397 = vadd.f32 0.0, %v396
    %398 = vdwg.mxu0
    %399 = vmatpush.msra.mxu0 0.0
    %400 = vmatpush.msra.mxu0 0.0
    %401 = vmatpush.msra.mxu0 0.0
    %402 = vmatpush.msra.mxu0 0.0
    %403 = vmatpush.msra.mxu0 0.0
    %404 = vmatpush.msra.mxu0 0.0
    %405 = vmatpush.msra.mxu0 0.0
    %406 = vmatpush.msra.mxu0 0.0
    %407 = vmatpush.msra.mxu0 %v375
    %408 = vmatpush.msra.mxu0 %v373
    %409 = vmatpush.msra.mxu0 %v371
    %410 = vmatpush.msra.mxu0 %v369
    %411 = vmatpush.msra.mxu0 %v367
    %412 = vmatpush.msra.mxu0 %v365
    %413 = vmatpush.msra.mxu0 %v363
    %414 = vmatpush.msra.mxu0 %v361
    %415 = vmatmul.f32.gmra.mxu0 %v377
    %v416 = vpop.f32.mrf.mxu0
    %v417 = vadd.f32 0.0, %v416
    %418 = vdwg.mxu0
    %v419 = vadd.f32 %v332, %v397
    %v420 = vadd.f32 %v355, %v417
    %v421 = vxor.u32 %v419, 2147483648
    %v422 = vmul.f32 %v421, 1.442695
    %v423 = vpow.pop %v422
    %v424 = vadd.f32 %v423, 1.0
    %v425 = vrcp.pop %v424
    %v426 = vmul.f32 %v424, %v425
    %v427 = vsub.f32 1.0, %v426
    %v428 = vmul.f32 %v425, %v427
    %v429 = vadd.f32 %v425, %v428
    %vm430 = vweird.f32 %v424
    %vm431 = vweird.f32 %v425
    %vm432 = vmor %vm430, %vm431
    %v433 = vsel %vm432, %v425, %v429
    %v434 = vand.u32 2147483647, %v424
    %vm435 = vcmp.eq.f32.partialorder %v434, 8.507059e+37
    %v436 = vand.u32 %v424, 2147483648
    %v437 = vor.u32 1.1754944e-38, %v436
    %v438 = vsel %vm435, %v437, %v433
    %v439 = vmul.f32 1.0, %v438
    %v440 = vtanh.pop %v420
    %v441 = vxor.u32 %v420, 2147483648
    %v442 = vmul.f32 %v441, 1.442695
    %v443 = vpow.pop %v442
    %v444 = vadd.f32 %v443, 1.0
    %v445 = vrcp.pop %v444
    %v446 = vmul.f32 %v444, %v445
    %v447 = vsub.f32 1.0, %v446
    %v448 = vmul.f32 %v445, %v447
    %v449 = vadd.f32 %v445, %v448
    %vm450 = vweird.f32 %v444
    %vm451 = vweird.f32 %v445
    %vm452 = vmor %vm450, %vm451
    %v453 = vsel %vm452, %v445, %v449
    %v454 = vand.u32 2147483647, %v444
    %vm455 = vcmp.eq.f32.partialorder %v454, 8.507059e+37
    %v456 = vand.u32 %v444, 2147483648
    %v457 = vor.u32 1.1754944e-38, %v456
    %v458 = vsel %vm455, %v457, %v453
    %v459 = vmul.f32 1.0, %v458
    %v460 = vmul.f32 %v439, 0.0
    %v461 = vmul.f32 %v439, %v440
    %463 = vrot.lane.b32.xlu0 %v461, 64
    %v464 = vpop.permute.xlu0 %463
    %v466 = vadd.f32 %v460, %v464
    %v467 = vtanh.pop %v466
    %v468 = vmul.f32 %v459, %v467
    %470 = vrot.lane.b32.xlu0 %v468, 64
    %v471 = vpop.permute.xlu0 %470
    %473 = vst.msk [vmem:[#allocation3] sm:$0xff] %vm376, %v471
    %v474 = vsel %vm376, %v471, 0
    %476 = vmatpush.msra.mxu0 0.0
    %477 = vmatpush.msra.mxu0 0.0
    %478 = vmatpush.msra.mxu0 0.0
    %479 = vmatpush.msra.mxu0 0.0
    %480 = vmatpush.msra.mxu0 0.0
    %481 = vmatpush.msra.mxu0 0.0
    %482 = vmatpush.msra.mxu0 0.0
    %483 = vmatpush.msra.mxu0 0.0
    %484 = vmatpush.msra.mxu0 %v374
    %485 = vmatpush.msra.mxu0 %v372
    %486 = vmatpush.msra.mxu0 %v370
    %487 = vmatpush.msra.mxu0 %v368
    %488 = vmatpush.msra.mxu0 %v366
    %489 = vmatpush.msra.mxu0 %v364
    %490 = vmatpush.msra.mxu0 %v362
    %491 = vmatpush.msra.mxu0 %v360
    %492 = vmatmul.f32.gmra.mxu0 %v474
    %v493 = vpop.f32.mrf.mxu0
    %v494 = vadd.f32 0.0, %v493
    %495 = vdwg.mxu0
    %496 = vmatpush.msra.mxu0 0.0
    %497 = vmatpush.msra.mxu0 0.0
    %498 = vmatpush.msra.mxu0 0.0
    %499 = vmatpush.msra.mxu0 0.0
    %500 = vmatpush.msra.mxu0 0.0
    %501 = vmatpush.msra.mxu0 0.0
    %502 = vmatpush.msra.mxu0 0.0
    %503 = vmatpush.msra.mxu0 0.0
    %504 = vmatpush.msra.mxu0 %v375
    %505 = vmatpush.msra.mxu0 %v373
    %506 = vmatpush.msra.mxu0 %v371
    %507 = vmatpush.msra.mxu0 %v369
    %508 = vmatpush.msra.mxu0 %v367
    %509 = vmatpush.msra.mxu0 %v365
    %510 = vmatpush.msra.mxu0 %v363
    %511 = vmatpush.msra.mxu0 %v361
    %512 = vmatmul.f32.gmra.mxu0 %v474
    %v513 = vpop.f32.mrf.mxu0
    %v514 = vadd.f32 0.0, %v513
    %515 = vdwg.mxu0
    %v516 = vadd.f32 %v335, %v494
    %v517 = vadd.f32 %v358, %v514
    %v518 = vxor.u32 %v516, 2147483648
    %v519 = vmul.f32 %v518, 1.442695
    %v520 = vpow.pop %v519
    %v521 = vadd.f32 %v520, 1.0
    %v522 = vrcp.pop %v521
    %v523 = vmul.f32 %v521, %v522
    %v524 = vsub.f32 1.0, %v523
    %v525 = vmul.f32 %v522, %v524
    %v526 = vadd.f32 %v522, %v525
    %vm527 = vweird.f32 %v521
    %vm528 = vweird.f32 %v522
    %vm529 = vmor %vm527, %vm528
    %v530 = vsel %vm529, %v522, %v526
    %v531 = vand.u32 2147483647, %v521
    %vm532 = vcmp.eq.f32.partialorder %v531, 8.507059e+37
    %v533 = vand.u32 %v521, 2147483648
    %v534 = vor.u32 1.1754944e-38, %v533
    %v535 = vsel %vm532, %v534, %v530
    %v536 = vmul.f32 1.0, %v535
    %v537 = vtanh.pop %v517
    %v538 = vxor.u32 %v517, 2147483648
    %v539 = vmul.f32 %v538, 1.442695
    %v540 = vpow.pop %v539
    %v541 = vadd.f32 %v540, 1.0
    %v542 = vrcp.pop %v541
    %v543 = vmul.f32 %v541, %v542
    %v544 = vsub.f32 1.0, %v543
    %v545 = vmul.f32 %v542, %v544
    %v546 = vadd.f32 %v542, %v545
    %vm547 = vweird.f32 %v541
    %vm548 = vweird.f32 %v542
    %vm549 = vmor %vm547, %vm548
    %v550 = vsel %vm549, %v542, %v546
    %v551 = vand.u32 2147483647, %v541
    %vm552 = vcmp.eq.f32.partialorder %v551, 8.507059e+37
    %v553 = vand.u32 %v541, 2147483648
    %v554 = vor.u32 1.1754944e-38, %v553
    %v555 = vsel %vm552, %v554, %v550
    %v556 = vmul.f32 1.0, %v555
    %v557 = vmul.f32 %v536, %v466
    %v558 = vmul.f32 %v536, %v537
    %560 = vrot.lane.b32.xlu0 %v558, 64
    %v561 = vpop.permute.xlu0 %560
    %v563 = vadd.f32 %v557, %v561
    %v564 = vtanh.pop %v563
    %v565 = vmul.f32 %v556, %v564
    %567 = vrot.lane.b32.xlu0 %v565, 64
    %v568 = vpop.permute.xlu0 %567
    %s570 = scalar_lea.vmem [#allocation3], 8
    %571 = vst.msk [vmem:[%s570] sm:$0xff] %vm376, %v568
    %v572 = vld [vmem:[#allocation3] sm:$0xff]
    %v573 = vld [vmem:[#allocation3 + $0x8] sm:$0xff]
    %v574 = vld [vmem:[#allocation12] sm:$0xff]
    %v575 = vld [vmem:[#allocation12 + $0x8] sm:$0xff]
    %v576 = vld [vmem:[#allocation12 + $0x10] sm:$0xff]
    %v577 = vld [vmem:[#allocation12 + $0x18] sm:$0xff]
    %v578 = vld [vmem:[#allocation12 + $0x20] sm:$0xff]
    %v579 = vld [vmem:[#allocation12 + $0x28] sm:$0xff]
    %v580 = vld [vmem:[#allocation12 + $0x30] sm:$0xff]
    %v581 = vld [vmem:[#allocation12 + $0x38] sm:$0xff]
    %s582 = scalar_lea.vmem [#allocation12], 64
    %v583 = vld [vmem:[%s582] sm:$0xff]
    %v584 = vld [vmem:[%s582 + $0x8] sm:$0xff]
    %v585 = vld [vmem:[%s582 + $0x10] sm:$0xff]
    %v586 = vld [vmem:[%s582 + $0x18] sm:$0xff]
    %v587 = vld [vmem:[%s582 + $0x20] sm:$0xff]
    %v588 = vld [vmem:[%s582 + $0x28] sm:$0xff]
    %v589 = vld [vmem:[%s582 + $0x30] sm:$0xff]
    %v590 = vld [vmem:[%s582 + $0x38] sm:$0xff]
    %v593 = vrot.slane %v572, 1
    %vm594 = vcmask 1041409
    %v595 = vsel %vm594, %v573, %v593
    %v596 = vsel %vm376, %v595, 0
    %598 = vmatpush.msra.mxu0 0.0
    %599 = vmatpush.msra.mxu0 0.0
    %600 = vmatpush.msra.mxu0 0.0
    %601 = vmatpush.msra.mxu0 0.0
    %602 = vmatpush.msra.mxu0 0.0
    %603 = vmatpush.msra.mxu0 0.0
    %604 = vmatpush.msra.mxu0 0.0
    %605 = vmatpush.msra.mxu0 0.0
    %606 = vmatpush.msra.mxu0 %v590
    %607 = vmatpush.msra.mxu0 %v589
    %608 = vmatpush.msra.mxu0 %v588
    %609 = vmatpush.msra.mxu0 %v587
    %610 = vmatpush.msra.mxu0 %v586
    %611 = vmatpush.msra.mxu0 %v585
    %612 = vmatpush.msra.mxu0 %v584
    %613 = vmatpush.msra.mxu0 %v583
    %614 = vmatmul.f32.gmra.mxu0 %v596
    %v615 = vpop.f32.mrf.mxu0
    %v616 = vadd.f32 0.0, %v615
    %617 = vdwg.mxu0
    %v618 = vrot.slane %v573, 7
    %v619 = vsel %vm594, %v618, %v572
    %v620 = vsel %vm376, %v619, 0
    %622 = vmatpush.msra.mxu0 0.0
    %623 = vmatpush.msra.mxu0 0.0
    %624 = vmatpush.msra.mxu0 0.0
    %625 = vmatpush.msra.mxu0 0.0
    %626 = vmatpush.msra.mxu0 0.0
    %627 = vmatpush.msra.mxu0 0.0
    %628 = vmatpush.msra.mxu0 0.0
    %629 = vmatpush.msra.mxu0 0.0
    %630 = vmatpush.msra.mxu0 %v581
    %631 = vmatpush.msra.mxu0 %v580
    %632 = vmatpush.msra.mxu0 %v579
    %633 = vmatpush.msra.mxu0 %v578
    %634 = vmatpush.msra.mxu0 %v577
    %635 = vmatpush.msra.mxu0 %v576
    %636 = vmatpush.msra.mxu0 %v575
    %637 = vmatpush.msra.mxu0 %v574
    %638 = vmatmul.f32.gmra.mxu0 %v620
    %v639 = vpop.f32.mrf.mxu0
    %v640 = vadd.f32 %v616, %v639
    %641 = vdwg.mxu0
    %s642 = scalar_lea.vmem [#allocation12], 128
    %v643 = vld [vmem:[%s642] sm:$0xff]
    %v644 = vld [vmem:[%s642 + $0x8] sm:$0xff]
    %v645 = vld [vmem:[%s642 + $0x10] sm:$0xff]
    %v646 = vld [vmem:[%s642 + $0x18] sm:$0xff]
    %v647 = vld [vmem:[%s642 + $0x20] sm:$0xff]
    %v648 = vld [vmem:[%s642 + $0x28] sm:$0xff]
    %v649 = vld [vmem:[%s642 + $0x30] sm:$0xff]
    %v650 = vld [vmem:[%s642 + $0x38] sm:$0xff]
    %v651 = vrot.slane %v572, 2
    %v652 = vrot.slane %v573, 1
    %v653 = vsel %vm594, %v652, %v651
    %v654 = vsel %vm376, %v653, 0
    %656 = vmatpush.msra.mxu0 0.0
    %657 = vmatpush.msra.mxu0 0.0
    %658 = vmatpush.msra.mxu0 0.0
    %659 = vmatpush.msra.mxu0 0.0
    %660 = vmatpush.msra.mxu0 0.0
    %661 = vmatpush.msra.mxu0 0.0
    %662 = vmatpush.msra.mxu0 0.0
    %663 = vmatpush.msra.mxu0 0.0
    %664 = vmatpush.msra.mxu0 %v650
    %665 = vmatpush.msra.mxu0 %v649
    %666 = vmatpush.msra.mxu0 %v648
    %667 = vmatpush.msra.mxu0 %v647
    %668 = vmatpush.msra.mxu0 %v646
    %669 = vmatpush.msra.mxu0 %v645
    %670 = vmatpush.msra.mxu0 %v644
    %671 = vmatpush.msra.mxu0 %v643
    %672 = vmatmul.f32.gmra.mxu0 %v654
    %v673 = vpop.f32.mrf.mxu0
    %v674 = vadd.f32 0.0, %v673
    %675 = vdwg.mxu0
    %v676 = vadd.f32 %v640, %v674
    %s677 = scalar_lea.vmem [#allocation12], 192
    %v678 = vld [vmem:[%s677] sm:$0xff]
    %v679 = vld [vmem:[%s677 + $0x8] sm:$0xff]
    %v680 = vld [vmem:[%s677 + $0x10] sm:$0xff]
    %v681 = vld [vmem:[%s677 + $0x18] sm:$0xff]
    %v682 = vld [vmem:[%s677 + $0x20] sm:$0xff]
    %v683 = vld [vmem:[%s677 + $0x28] sm:$0xff]
    %v684 = vld [vmem:[%s677 + $0x30] sm:$0xff]
    %v685 = vld [vmem:[%s677 + $0x38] sm:$0xff]
    %v686 = vrot.slane %v572, 3
    %v687 = vrot.slane %v573, 2
    %v688 = vsel %vm594, %v687, %v686
    %v689 = vsel %vm376, %v688, 0
    %691 = vmatpush.msra.mxu0 0.0
    %692 = vmatpush.msra.mxu0 0.0
    %693 = vmatpush.msra.mxu0 0.0
    %694 = vmatpush.msra.mxu0 0.0
    %695 = vmatpush.msra.mxu0 0.0
    %696 = vmatpush.msra.mxu0 0.0
    %697 = vmatpush.msra.mxu0 0.0
    %698 = vmatpush.msra.mxu0 0.0
    %699 = vmatpush.msra.mxu0 %v685
    %700 = vmatpush.msra.mxu0 %v684
    %701 = vmatpush.msra.mxu0 %v683
    %702 = vmatpush.msra.mxu0 %v682
    %703 = vmatpush.msra.mxu0 %v681
    %704 = vmatpush.msra.mxu0 %v680
    %705 = vmatpush.msra.mxu0 %v679
    %706 = vmatpush.msra.mxu0 %v678
    %707 = vmatmul.f32.gmra.mxu0 %v689
    %v708 = vpop.f32.mrf.mxu0
    %v709 = vadd.f32 0.0, %v708
    %710 = vdwg.mxu0
    %v711 = vadd.f32 %v676, %v709
    %s712 = scalar_lea.vmem [#allocation12], 256
    %v713 = vld [vmem:[%s712] sm:$0xff]
    %v714 = vld [vmem:[%s712 + $0x8] sm:$0xff]
    %v715 = vld [vmem:[%s712 + $0x10] sm:$0xff]
    %v716 = vld [vmem:[%s712 + $0x18] sm:$0xff]
    %v717 = vld [vmem:[%s712 + $0x20] sm:$0xff]
    %v718 = vld [vmem:[%s712 + $0x28] sm:$0xff]
    %v719 = vld [vmem:[%s712 + $0x30] sm:$0xff]
    %v720 = vld [vmem:[%s712 + $0x38] sm:$0xff]
    %v721 = vrot.slane %v572, 4
    %v722 = vrot.slane %v573, 3
    %v723 = vsel %vm594, %v722, %v721
    %v724 = vsel %vm376, %v723, 0
    %726 = vmatpush.msra.mxu0 0.0
    %727 = vmatpush.msra.mxu0 0.0
    %728 = vmatpush.msra.mxu0 0.0
    %729 = vmatpush.msra.mxu0 0.0
    %730 = vmatpush.msra.mxu0 0.0
    %731 = vmatpush.msra.mxu0 0.0
    %732 = vmatpush.msra.mxu0 0.0
    %733 = vmatpush.msra.mxu0 0.0
    %734 = vmatpush.msra.mxu0 %v720
    %735 = vmatpush.msra.mxu0 %v719
    %736 = vmatpush.msra.mxu0 %v718
    %737 = vmatpush.msra.mxu0 %v717
    %738 = vmatpush.msra.mxu0 %v716
    %739 = vmatpush.msra.mxu0 %v715
    %740 = vmatpush.msra.mxu0 %v714
    %741 = vmatpush.msra.mxu0 %v713
    %742 = vmatmul.f32.gmra.mxu0 %v724
    %v743 = vpop.f32.mrf.mxu0
    %v744 = vadd.f32 0.0, %v743
    %745 = vdwg.mxu0
    %v746 = vadd.f32 %v711, %v744
    %s747 = scalar_lea.vmem [#allocation12], 320
    %v748 = vld [vmem:[%s747] sm:$0xff]
    %v749 = vld [vmem:[%s747 + $0x8] sm:$0xff]
    %v750 = vld [vmem:[%s747 + $0x10] sm:$0xff]
    %v751 = vld [vmem:[%s747 + $0x18] sm:$0xff]
    %v752 = vld [vmem:[%s747 + $0x20] sm:$0xff]
    %v753 = vld [vmem:[%s747 + $0x28] sm:$0xff]
    %v754 = vld [vmem:[%s747 + $0x30] sm:$0xff]
    %v755 = vld [vmem:[%s747 + $0x38] sm:$0xff]
    %v756 = vrot.slane %v572, 5
    %v757 = vrot.slane %v573, 4
    %v758 = vsel %vm594, %v757, %v756
    %v759 = vsel %vm376, %v758, 0
    %761 = vmatpush.msra.mxu0 0.0
    %762 = vmatpush.msra.mxu0 0.0
    %763 = vmatpush.msra.mxu0 0.0
    %764 = vmatpush.msra.mxu0 0.0
    %765 = vmatpush.msra.mxu0 0.0
    %766 = vmatpush.msra.mxu0 0.0
    %767 = vmatpush.msra.mxu0 0.0
    %768 = vmatpush.msra.mxu0 0.0
    %769 = vmatpush.msra.mxu0 %v755
    %770 = vmatpush.msra.mxu0 %v754
    %771 = vmatpush.msra.mxu0 %v753
    %772 = vmatpush.msra.mxu0 %v752
    %773 = vmatpush.msra.mxu0 %v751
    %774 = vmatpush.msra.mxu0 %v750
    %775 = vmatpush.msra.mxu0 %v749
    %776 = vmatpush.msra.mxu0 %v748
    %777 = vmatmul.f32.gmra.mxu0 %v759
    %v778 = vpop.f32.mrf.mxu0
    %v779 = vadd.f32 0.0, %v778
    %780 = vdwg.mxu0
    %v781 = vadd.f32 %v746, %v779
    %s782 = scalar_lea.vmem [#allocation12], 384
    %v783 = vld [vmem:[%s782] sm:$0xff]
    %v784 = vld [vmem:[%s782 + $0x8] sm:$0xff]
    %v785 = vld [vmem:[%s782 + $0x10] sm:$0xff]
    %v786 = vld [vmem:[%s782 + $0x18] sm:$0xff]
    %v787 = vld [vmem:[%s782 + $0x20] sm:$0xff]
    %v788 = vld [vmem:[%s782 + $0x28] sm:$0xff]
    %v789 = vld [vmem:[%s782 + $0x30] sm:$0xff]
    %v790 = vld [vmem:[%s782 + $0x38] sm:$0xff]
    %v791 = vrot.slane %v572, 6
    %v792 = vrot.slane %v573, 5
    %v793 = vsel %vm594, %v792, %v791
    %v794 = vsel %vm376, %v793, 0
    %796 = vmatpush.msra.mxu0 0.0
    %797 = vmatpush.msra.mxu0 0.0
    %798 = vmatpush.msra.mxu0 0.0
    %799 = vmatpush.msra.mxu0 0.0
    %800 = vmatpush.msra.mxu0 0.0
    %801 = vmatpush.msra.mxu0 0.0
    %802 = vmatpush.msra.mxu0 0.0
    %803 = vmatpush.msra.mxu0 0.0
    %804 = vmatpush.msra.mxu0 %v790
    %805 = vmatpush.msra.mxu0 %v789
    %806 = vmatpush.msra.mxu0 %v788
    %807 = vmatpush.msra.mxu0 %v787
    %808 = vmatpush.msra.mxu0 %v786
    %809 = vmatpush.msra.mxu0 %v785
    %810 = vmatpush.msra.mxu0 %v784
    %811 = vmatpush.msra.mxu0 %v783
    %812 = vmatmul.f32.gmra.mxu0 %v794
    %v813 = vpop.f32.mrf.mxu0
    %v814 = vadd.f32 0.0, %v813
    %815 = vdwg.mxu0
    %v816 = vadd.f32 %v781, %v814
    %s817 = scalar_lea.vmem [#allocation12], 448
    %v818 = vld [vmem:[%s817] sm:$0xff]
    %v819 = vld [vmem:[%s817 + $0x8] sm:$0xff]
    %v820 = vld [vmem:[%s817 + $0x10] sm:$0xff]
    %v821 = vld [vmem:[%s817 + $0x18] sm:$0xff]
    %v822 = vld [vmem:[%s817 + $0x20] sm:$0xff]
    %v823 = vld [vmem:[%s817 + $0x28] sm:$0xff]
    %v824 = vld [vmem:[%s817 + $0x30] sm:$0xff]
    %v825 = vld [vmem:[%s817 + $0x38] sm:$0xff]
    %v826 = vrot.slane %v572, 7
    %v827 = vrot.slane %v573, 6
    %v828 = vsel %vm594, %v827, %v826
    %v829 = vsel %vm376, %v828, 0
    %831 = vmatpush.msra.mxu0 0.0
    %832 = vmatpush.msra.mxu0 0.0
    %833 = vmatpush.msra.mxu0 0.0
    %834 = vmatpush.msra.mxu0 0.0
    %835 = vmatpush.msra.mxu0 0.0
    %836 = vmatpush.msra.mxu0 0.0
    %837 = vmatpush.msra.mxu0 0.0
    %838 = vmatpush.msra.mxu0 0.0
    %839 = vmatpush.msra.mxu0 %v825
    %840 = vmatpush.msra.mxu0 %v824
    %841 = vmatpush.msra.mxu0 %v823
    %842 = vmatpush.msra.mxu0 %v822
    %843 = vmatpush.msra.mxu0 %v821
    %844 = vmatpush.msra.mxu0 %v820
    %845 = vmatpush.msra.mxu0 %v819
    %846 = vmatpush.msra.mxu0 %v818
    %847 = vmatmul.f32.gmra.mxu0 %v829
    %v848 = vpop.f32.mrf.mxu0
    %v849 = vadd.f32 0.0, %v848
    %850 = vdwg.mxu0
    %v851 = vadd.f32 %v816, %v849
    %v852 = vld [vmem:[%s8] sm:$0x1]
    %v854 = vperm.slane %v852, 0
    %v856 = vadd.f32 %v851, %v854
    %v857 = vld [vmem:[%s9] sm:$0xff]
    %v858 = vld [vmem:[%s9 + $0x8] sm:$0xff]
    %v859 = vld [vmem:[%s9 + $0x10] sm:$0xff]
    %v860 = vld [vmem:[%s9 + $0x18] sm:$0xff]
    %v861 = vld [vmem:[%s9 + $0x20] sm:$0xff]
    %v862 = vld [vmem:[%s9 + $0x28] sm:$0xff]
    %v863 = vld [vmem:[%s9 + $0x30] sm:$0xff]
    %v864 = vld [vmem:[%s9 + $0x38] sm:$0xff]
    %v865 = vld [vmem:[%s9 + $0x40] sm:$0xff]
    %v866 = vld [vmem:[%s9 + $0x48] sm:$0xff]
    %v867 = vld [vmem:[%s9 + $0x50] sm:$0xff]
    %v868 = vld [vmem:[%s9 + $0x58] sm:$0xff]
    %v869 = vld [vmem:[%s9 + $0x60] sm:$0xff]
    %v870 = vld [vmem:[%s9 + $0x68] sm:$0xff]
    %v871 = vld [vmem:[%s9 + $0x70] sm:$0xff]
    %v872 = vld [vmem:[%s9 + $0x78] sm:$0xff]
    %v873 = vld [vmem:[#allocation4] sm:$0x1]
    %v875 = vperm.slane %v873, 0
    %877 = vmatpush.msra.mxu0 %v872
    %878 = vmatpush.msra.mxu0 %v871
    %879 = vmatpush.msra.mxu0 %v870
    %880 = vmatpush.msra.mxu0 %v869
    %881 = vmatpush.msra.mxu0 %v868
    %882 = vmatpush.msra.mxu0 %v867
    %883 = vmatpush.msra.mxu0 %v866
    %884 = vmatpush.msra.mxu0 %v865
    %885 = vmatpush.msra.mxu0 %v864
    %886 = vmatpush.msra.mxu0 %v863
    %887 = vmatpush.msra.mxu0 %v862
    %888 = vmatpush.msra.mxu0 %v861
    %889 = vmatpush.msra.mxu0 %v860
    %890 = vmatpush.msra.mxu0 %v859
    %891 = vmatpush.msra.mxu0 %v858
    %892 = vmatpush.msra.mxu0 %v857
    %893 = vmatmul.f32.gmra.mxu0 %v856
    %v894 = vpop.f32.mrf.mxu0
    %v895 = vadd.f32 %v875, %v894
    %896 = vdwg.mxu0
    %vm897 = vcmask 1024
    %898 = vst.msk [vmem:[%s11] sm:$0x3] %vm897, %v895
    // Predicated region
    $region66: #{tpu_custom_call.1} parent=1 // pred_check
      _
    $region67: #{tpu_custom_call.1} parent=1 // pred_check_branch
      %900 = sbr.rel (0) target = $region69
    $region68: #{tpu_custom_call.1} parent=1 // pred_region
      _
    $region69: #{tpu_custom_call.1} parent=1 // pred_fallthru
      _
    // Predicated region
    $region70: #{tpu_custom_call.1} parent=1 // pred_check
      _
    $region71: #{tpu_custom_call.1} parent=1 // pred_check_branch
      %902 = sbr.rel (0) target = $region73
    $region72: #{tpu_custom_call.1} parent=1 // pred_region
      _
    $region73: #{tpu_custom_call.1} parent=1 // pred_fallthru
      _
    %903 = vsyncpa [#allocation6], 1
    %904 = vsyncpa [#allocation8], 1
    %905 = vsyncpa [#allocation11], 1

</llo_original>
